<compile_context>
chip_gen: v7x
topology: tpu7x:2x2x1
jax: 0.10.0
libtpu: 0.0.40
codegen_flags: <defaults>
</compile_context>

<pallas_src>
import functools

import jax
import jax.numpy as jnp
from jax.experimental import pallas as pl
from jax.experimental.pallas import tpu as pltpu


# --------------------------- in-kernel helpers ---------------------------

def _conv1d_k3(xpad, w2d, bias, *, tb, t_in, mxu_dtype):
    """k=3 / stride-1 conv over per-batch lane segments as a single im2col matmul.

    xpad : (Cp, tb*t_in) f32, per-batch contiguous segments of length t_in (pre-padded)
    w2d  : (Cp, 3*Cp)    weight matrix, columns ordered (k, cin)
    bias : (Cp, 1)
    returns (Cp, tb*(t_in-2)) f32
    """
    t_out = t_in - 2
    cols = []
    for b in range(tb):                       # static unroll over batch tile
        base = b * t_in
        taps = [xpad[:, base + k: base + k + t_out] for k in range(3)]
        cols.append(jnp.concatenate(taps, axis=0))            # (3*Cp, t_out)
    g = cols[0] if tb == 1 else jnp.concatenate(cols, axis=1)  # (3*Cp, tb*t_out)
    out = jnp.dot(w2d.astype(mxu_dtype), g.astype(mxu_dtype),
                  preferred_element_type=jnp.float32)          # (Cp, tb*t_out)
    return out + bias


def _reflect_pad2(x, *, tb, t):
    """Per-batch ReflectionPad1d(2): (Cp, tb*t) -> (Cp, tb*(t+4))."""
    pieces = []
    for b in range(tb):
        s = b * t
        xb = x[:, s:s + t]
        pieces += [xb[:, 2:3], xb[:, 1:2], xb,
                   xb[:, t - 2:t - 1], xb[:, t - 3:t - 2]]
    return jnp.concatenate(pieces, axis=1)


def _operator(xpad, w1, b1, w2, b2, *, tb, t_out, mxu_dtype):
    """Operator() applied to an already reflection-padded input (Cp, tb*(t_out+4))."""
    h = _conv1d_k3(xpad, w1, b1, tb=tb, t_in=t_out + 4, mxu_dtype=mxu_dtype)
    h = jnp.where(h >= 0, h, 0.01 * h)        # LeakyReLU(0.01); Dropout(0.0) == identity
    h = _conv1d_k3(h, w2, b2, tb=tb, t_in=t_out + 2, mxu_dtype=mxu_dtype)
    return jnp.tanh(h)                        # EUP


def _lifting_kernel(xe_ref, xop_ref,
                    wu1_ref, bu1_ref, wu2_ref, bu2_ref,
                    wp1_ref, bp1_ref, wp2_ref, bp2_ref,
                    c_ref, d_ref, *, tb, lh, mxu_dtype):
    lp = lh + 4
    xe = xe_ref[...].astype(jnp.float32)      # (Cp, tb*lh)   even part, lane-dense
    xop = xop_ref[...].astype(jnp.float32)    # (Cp, tb*lp)   odd part, pre reflect-padded

    # c = x_even + U(x_odd)
    u = _operator(xop, wu1_ref[...], bu1_ref[...], wu2_ref[...], bu2_ref[...],
                  tb=tb, t_out=lh, mxu_dtype=mxu_dtype)
    c = xe + u

    # d = x_odd - P(c)
    cpad = _reflect_pad2(c, tb=tb, t=lh)
    p = _operator(cpad, wp1_ref[...], bp1_ref[...], wp2_ref[...], bp2_ref[...],
                  tb=tb, t_out=lh, mxu_dtype=mxu_dtype)
    xo_pieces = [xop[:, b * lp + 2: b * lp + 2 + lh] for b in range(tb)]
    xo = xo_pieces[0] if tb == 1 else jnp.concatenate(xo_pieces, axis=1)
    d = xo - p

    c_ref[...] = c.astype(c_ref.dtype)
    d_ref[...] = d.astype(d_ref.dtype)


# ------------------------------- wrapper --------------------------------

def lifting_scheme(x, params, *, mxu_dtype=jnp.float32, tb=None):
    """LiftingScheme forward. x: (B, C, L) float -> (c, d), each (B, C, L//2).

    mxu_dtype: dtype of the matmul operands (use jnp.bfloat16 on v6e/v7x for ~2x MXU
               throughput; accumulation and all elementwise math stay in float32).
    tb:        batch elements per grid step. Default folds the whole batch into one
               lane-dense slab (grid overhead amortized). For very large B, pass a
               smaller tb (ideally with tb*Lh and tb*(Lh+4) multiples of 128) to keep
               per-step VMEM bounded and give v7x's two TensorCores >=2 parallel steps.
    """
    B, C, L = x.shape
    if L % 2 != 0:
        raise ValueError("L must be even")
    Lh = L // 2
    if Lh < 3:
        raise ValueError("need L//2 >= 3 for ReflectionPad1d(2)")
    if tb is None:
        tb = B
    if B % tb != 0:
        raise ValueError("tb must divide B")

    Cp = ((C + 7) // 8) * 8       # pad channels to the f32 sublane tile
    Lp = Lh + 4

    # Splitting(): even/odd de-interleave.  (Done XLA-side; could be fused into the
    # producer to save one HBM round-trip on memory-bound workloads.)
    x_even = x[:, :, ::2]         # (B, C, Lh)
    x_odd = x[:, :, 1::2]

    def to_slab(a, reflect):
        a = jnp.transpose(a, (1, 0, 2))                     # (C, B, T)
        a = jnp.pad(a, ((0, Cp - C), (0, 0), (0, 0)))       # (Cp, B, T) zero-pad channels
        if reflect:                                          # ReflectionPad1d(2)
            a = jnp.pad(a, ((0, 0), (0, 0), (2, 2)), mode="reflect")
        return a.reshape(Cp, -1)                            # (Cp, B*T)

    xe_slab = to_slab(x_even, False)      # (Cp, B*Lh)
    xop_slab = to_slab(x_odd, True)       # (Cp, B*(Lh+4))

    # Conv weights (Cout, Cin, 3) -> im2col matrix (Cp, 3*Cp), columns ordered (k, cin).
    def wmat(w):
        w = jnp.pad(w, ((0, Cp - C), (0, Cp - C), (0, 0)))  # (Cp, Cp, 3)
        return jnp.transpose(w, (0, 2, 1)).reshape(Cp, 3 * Cp)

    def bcol(b):
        return jnp.pad(b, (0, Cp - C)).reshape(Cp, 1)

    args = (xe_slab, xop_slab,
            wmat(params["Wu1"]), bcol(params["bu1"]),
            wmat(params["Wu2"]), bcol(params["bu2"]),
            wmat(params["Wp1"]), bcol(params["bp1"]),
            wmat(params["Wp2"]), bcol(params["bp2"]))

    slab_spec = pl.BlockSpec((Cp, tb * Lh), lambda i: (0, i))    # lane-dense in/out
    xop_spec = pl.BlockSpec((Cp, tb * Lp), lambda i: (0, i))
    w_spec = pl.BlockSpec((Cp, 3 * Cp), lambda i: (0, 0))        # grid-invariant operands
    b_spec = pl.BlockSpec((Cp, 1), lambda i: (0, 0))

    kernel = functools.partial(_lifting_kernel, tb=tb, lh=Lh, mxu_dtype=mxu_dtype)

    c_slab, d_slab = pl.pallas_call(
        kernel,
        out_shape=(jax.ShapeDtypeStruct((Cp, B * Lh), x.dtype),
                   jax.ShapeDtypeStruct((Cp, B * Lh), x.dtype)),
        grid_spec=pltpu.PrefetchScalarGridSpec(
            num_scalar_prefetch=0,
            grid=(B // tb,),
            in_specs=[slab_spec, xop_spec,
                      w_spec, b_spec, w_spec, b_spec,
                      w_spec, b_spec, w_spec, b_spec],
            out_specs=[slab_spec, slab_spec],
        ),
        compiler_params=pltpu.CompilerParams(
            dimension_semantics=("parallel",)),
    )(*args)

    def from_slab(s):
        return jnp.transpose(s[:C].reshape(C, B, Lh), (1, 0, 2))   # back to (B, C, Lh)

    return from_slab(c_slab), from_slab(d_slab)


# ---------------- pure-JAX reference (for validation) ----------------

def _ref_operator(x, w1, b1, w2, b2):
    xp = jnp.pad(x, ((0, 0), (0, 0), (2, 2)), mode="reflect")
    dn = ("NCH", "OIH", "NCH")
    h = jax.lax.conv_general_dilated(xp, w1, (1,), "VALID",
                                     dimension_numbers=dn) + b1[None, :, None]
    h = jnp.where(h >= 0, h, 0.01 * h)
    h = jax.lax.conv_general_dilated(h, w2, (1,), "VALID",
                                     dimension_numbers=dn) + b2[None, :, None]
    return jnp.tanh(h)


def _ref_lifting(x, p):
    xe, xo = x[:, :, ::2], x[:, :, 1::2]
    c = xe + _ref_operator(xo, p["Wu1"], p["bu1"], p["Wu2"], p["bu2"])
    d = xo - _ref_operator(c, p["Wp1"], p["bp1"], p["Wp2"], p["bp2"])
    return c, d


if __name__ == "__main__":
    B, C, L = 2, 4, 16      # in_planes=4, sequence length 16 -> Lh = 8
    key = jax.random.PRNGKey(0)
    kx, *kw = jax.random.split(key, 9)

    x = jax.random.normal(kx, (B, C, L), dtype=jnp.float32)

    # deterministic conv parameter init, PyTorch-like uniform(-1/sqrt(fan_in), ..)
    bound = 1.0 / jnp.sqrt(jnp.float32(C * 3))

    def u(k, shape):
        return jax.random.uniform(k, shape, jnp.float32, -bound, bound)

    params = {
        "Wu1": u(kw[0], (C, C, 3)), "bu1": u(kw[1], (C,)),
        "Wu2": u(kw[2], (C, C, 3)), "bu2": u(kw[3], (C,)),
        "Wp1": u(kw[4], (C, C, 3)), "bp1": u(kw[5], (C,)),
        "Wp2": u(kw[6], (C, C, 3)), "bp2": u(kw[7], (C,)),
    }

    c_ref, d_ref = _ref_lifting(x, params)

    # f32 MXU operands: bit-for-bit-ish match with the XLA reference.
    c, d = lifting_scheme(x, params)
    jax.block_until_ready((c, d))
    assert c.shape == (B, C, L // 2) and d.shape == (B, C, L // 2)
    assert jnp.allclose(c, c_ref, atol=1e-4, rtol=1e-4)
    assert jnp.allclose(d, d_ref, atol=1e-4, rtol=1e-4)

    # bf16 MXU operands (recommended on v6e/v7x); f32 accumulate + f32 elementwise,
    # so only a loose numerical check is meaningful here.
    c_bf, d_bf = lifting_scheme(x, params, mxu_dtype=jnp.bfloat16)
    jax.block_until_ready((c_bf, d_bf))
    assert jnp.allclose(c_bf, c_ref, atol=1e-1, rtol=1e-1)
    assert jnp.allclose(d_bf, d_ref, atol=1e-1, rtol=1e-1)

    print("KERNEL_OK")
</pallas_src>

<mosaic_0001>
module attributes {stable_mosaic.version = 11 : i64} {
  func.func @_lifting_kernel(%arg0: i32, %arg1: memref<8x16xf32, #tpu.memory_space<vmem>>, %arg2: memref<8x24xf32, #tpu.memory_space<vmem>>, %arg3: memref<8x24xf32, #tpu.memory_space<vmem>>, %arg4: memref<8x1xf32, #tpu.memory_space<vmem>>, %arg5: memref<8x24xf32, #tpu.memory_space<vmem>>, %arg6: memref<8x1xf32, #tpu.memory_space<vmem>>, %arg7: memref<8x24xf32, #tpu.memory_space<vmem>>, %arg8: memref<8x1xf32, #tpu.memory_space<vmem>>, %arg9: memref<8x24xf32, #tpu.memory_space<vmem>>, %arg10: memref<8x1xf32, #tpu.memory_space<vmem>>, %arg11: memref<8x16xf32, #tpu.memory_space<vmem>>, %arg12: memref<8x16xf32, #tpu.memory_space<vmem>>) attributes {dimension_semantics = [#tpu.dimension_semantics<parallel>], iteration_bounds = array<i64: 1>, scalar_prefetch = 0 : i64, scratch_operands = 0 : i64, tpu.core_type = #tpu.core_type<tc>, window_params = [{transform_indices = @transform_0, window_bounds = array<i64: 8, 16>}, {transform_indices = @transform_1, window_bounds = array<i64: 8, 24>}, {pipeline_mode = #tpu.pipeline_mode<synchronous>, transform_indices = @transform_2, window_bounds = array<i64: 8, 24>}, {pipeline_mode = #tpu.pipeline_mode<synchronous>, transform_indices = @transform_3, window_bounds = array<i64: 8, 1>}, {pipeline_mode = #tpu.pipeline_mode<synchronous>, transform_indices = @transform_4, window_bounds = array<i64: 8, 24>}, {pipeline_mode = #tpu.pipeline_mode<synchronous>, transform_indices = @transform_5, window_bounds = array<i64: 8, 1>}, {pipeline_mode = #tpu.pipeline_mode<synchronous>, transform_indices = @transform_6, window_bounds = array<i64: 8, 24>}, {pipeline_mode = #tpu.pipeline_mode<synchronous>, transform_indices = @transform_7, window_bounds = array<i64: 8, 1>}, {pipeline_mode = #tpu.pipeline_mode<synchronous>, transform_indices = @transform_8, window_bounds = array<i64: 8, 24>}, {pipeline_mode = #tpu.pipeline_mode<synchronous>, transform_indices = @transform_9, window_bounds = array<i64: 8, 1>}, {transform_indices = @transform_10, window_bounds = array<i64: 8, 16>}, {transform_indices = @transform_11, window_bounds = array<i64: 8, 16>}]} {
    %c0 = arith.constant 0 : index
    %c0_0 = arith.constant 0 : index
    %0 = vector.load %arg1[%c0, %c0_0] : memref<8x16xf32, #tpu.memory_space<vmem>>, vector<8x16xf32>
    %c0_1 = arith.constant 0 : index
    %c0_2 = arith.constant 0 : index
    %1 = vector.load %arg2[%c0_1, %c0_2] : memref<8x24xf32, #tpu.memory_space<vmem>>, vector<8x24xf32>
    %c0_3 = arith.constant 0 : index
    %c0_4 = arith.constant 0 : index
    %2 = vector.load %arg3[%c0_3, %c0_4] : memref<8x24xf32, #tpu.memory_space<vmem>>, vector<8x24xf32>
    %c0_5 = arith.constant 0 : index
    %c0_6 = arith.constant 0 : index
    %3 = vector.load %arg4[%c0_5, %c0_6] : memref<8x1xf32, #tpu.memory_space<vmem>>, vector<8x1xf32>
    %c0_7 = arith.constant 0 : index
    %c0_8 = arith.constant 0 : index
    %4 = vector.load %arg5[%c0_7, %c0_8] : memref<8x24xf32, #tpu.memory_space<vmem>>, vector<8x24xf32>
    %c0_9 = arith.constant 0 : index
    %c0_10 = arith.constant 0 : index
    %5 = vector.load %arg6[%c0_9, %c0_10] : memref<8x1xf32, #tpu.memory_space<vmem>>, vector<8x1xf32>
    %6 = vector.extract_strided_slice %1 {offsets = [0, 0], sizes = [8, 10], strides = [1, 1]} : vector<8x24xf32> to vector<8x10xf32>
    %7 = vector.extract_strided_slice %1 {offsets = [0, 1], sizes = [8, 10], strides = [1, 1]} : vector<8x24xf32> to vector<8x10xf32>
    %8 = vector.extract_strided_slice %1 {offsets = [0, 2], sizes = [8, 10], strides = [1, 1]} : vector<8x24xf32> to vector<8x10xf32>
    %9 = tpu.concatenate %6, %7, %8 in 0 : vector<8x10xf32>, vector<8x10xf32>, vector<8x10xf32> -> vector<24x10xf32>
    %10 = vector.extract_strided_slice %1 {offsets = [0, 12], sizes = [8, 10], strides = [1, 1]} : vector<8x24xf32> to vector<8x10xf32>
    %11 = vector.extract_strided_slice %1 {offsets = [0, 13], sizes = [8, 10], strides = [1, 1]} : vector<8x24xf32> to vector<8x10xf32>
    %12 = vector.extract_strided_slice %1 {offsets = [0, 14], sizes = [8, 10], strides = [1, 1]} : vector<8x24xf32> to vector<8x10xf32>
    %13 = tpu.concatenate %10, %11, %12 in 0 : vector<8x10xf32>, vector<8x10xf32>, vector<8x10xf32> -> vector<24x10xf32>
    %14 = tpu.concatenate %9, %13 in 1 : vector<24x10xf32>, vector<24x10xf32> -> vector<24x20xf32>
    %cst = arith.constant dense<0.000000e+00> : vector<8x20xf32>
    %15 = tpu.matmul %2, %14, %cst {dimension_numbers = #tpu.dot_dimension_numbers<[1], [0], [0], [1], [0, 0, 1, 1], [], []>} : vector<8x24xf32>, vector<24x20xf32>, vector<8x20xf32> -> vector<8x20xf32>
    %16 = vector.broadcast %3 : vector<8x1xf32> to vector<8x20xf32>
    %17 = arith.addf %15, %16 : vector<8x20xf32>
    %cst_11 = arith.constant 0.000000e+00 : f32
    %18 = vector.broadcast %cst_11 : f32 to vector<8x20xf32>
    %19 = arith.cmpf oge, %17, %18 : vector<8x20xf32>
    %cst_12 = arith.constant 0.00999999977 : f32
    %20 = vector.broadcast %cst_12 : f32 to vector<8x20xf32>
    %21 = arith.mulf %20, %17 : vector<8x20xf32>
    %22 = arith.select %19, %17, %21 : vector<8x20xi1>, vector<8x20xf32>
    %23 = vector.extract_strided_slice %22 {offsets = [0, 0], sizes = [8, 8], strides = [1, 1]} : vector<8x20xf32> to vector<8x8xf32>
    %24 = vector.extract_strided_slice %22 {offsets = [0, 1], sizes = [8, 8], strides = [1, 1]} : vector<8x20xf32> to vector<8x8xf32>
    %25 = vector.extract_strided_slice %22 {offsets = [0, 2], sizes = [8, 8], strides = [1, 1]} : vector<8x20xf32> to vector<8x8xf32>
    %26 = tpu.concatenate %23, %24, %25 in 0 : vector<8x8xf32>, vector<8x8xf32>, vector<8x8xf32> -> vector<24x8xf32>
    %27 = vector.extract_strided_slice %22 {offsets = [0, 10], sizes = [8, 8], strides = [1, 1]} : vector<8x20xf32> to vector<8x8xf32>
    %28 = vector.extract_strided_slice %22 {offsets = [0, 11], sizes = [8, 8], strides = [1, 1]} : vector<8x20xf32> to vector<8x8xf32>
    %29 = vector.extract_strided_slice %22 {offsets = [0, 12], sizes = [8, 8], strides = [1, 1]} : vector<8x20xf32> to vector<8x8xf32>
    %30 = tpu.concatenate %27, %28, %29 in 0 : vector<8x8xf32>, vector<8x8xf32>, vector<8x8xf32> -> vector<24x8xf32>
    %31 = tpu.concatenate %26, %30 in 1 : vector<24x8xf32>, vector<24x8xf32> -> vector<24x16xf32>
    %cst_13 = arith.constant dense<0.000000e+00> : vector<8x16xf32>
    %32 = tpu.matmul %4, %31, %cst_13 {dimension_numbers = #tpu.dot_dimension_numbers<[1], [0], [0], [1], [0, 0, 1, 1], [], []>} : vector<8x24xf32>, vector<24x16xf32>, vector<8x16xf32> -> vector<8x16xf32>
    %33 = vector.broadcast %5 : vector<8x1xf32> to vector<8x16xf32>
    %34 = arith.addf %32, %33 : vector<8x16xf32>
    %35 = math.tanh %34 : vector<8x16xf32>
    %36 = arith.addf %0, %35 : vector<8x16xf32>
    %37 = vector.extract_strided_slice %36 {offsets = [0, 0], sizes = [8, 8], strides = [1, 1]} : vector<8x16xf32> to vector<8x8xf32>
    %38 = vector.extract_strided_slice %37 {offsets = [0, 2], sizes = [8, 1], strides = [1, 1]} : vector<8x8xf32> to vector<8x1xf32>
    %39 = vector.extract_strided_slice %37 {offsets = [0, 1], sizes = [8, 1], strides = [1, 1]} : vector<8x8xf32> to vector<8x1xf32>
    %40 = vector.extract_strided_slice %37 {offsets = [0, 6], sizes = [8, 1], strides = [1, 1]} : vector<8x8xf32> to vector<8x1xf32>
    %41 = vector.extract_strided_slice %37 {offsets = [0, 5], sizes = [8, 1], strides = [1, 1]} : vector<8x8xf32> to vector<8x1xf32>
    %42 = vector.extract_strided_slice %36 {offsets = [0, 8], sizes = [8, 8], strides = [1, 1]} : vector<8x16xf32> to vector<8x8xf32>
    %43 = vector.extract_strided_slice %42 {offsets = [0, 2], sizes = [8, 1], strides = [1, 1]} : vector<8x8xf32> to vector<8x1xf32>
    %44 = vector.extract_strided_slice %42 {offsets = [0, 1], sizes = [8, 1], strides = [1, 1]} : vector<8x8xf32> to vector<8x1xf32>
    %45 = vector.extract_strided_slice %42 {offsets = [0, 6], sizes = [8, 1], strides = [1, 1]} : vector<8x8xf32> to vector<8x1xf32>
    %46 = vector.extract_strided_slice %42 {offsets = [0, 5], sizes = [8, 1], strides = [1, 1]} : vector<8x8xf32> to vector<8x1xf32>
    %47 = tpu.concatenate %38, %39, %37, %40, %41, %43, %44, %42, %45, %46 in 1 : vector<8x1xf32>, vector<8x1xf32>, vector<8x8xf32>, vector<8x1xf32>, vector<8x1xf32>, vector<8x1xf32>, vector<8x1xf32>, vector<8x8xf32>, vector<8x1xf32>, vector<8x1xf32> -> vector<8x24xf32>
    %c0_14 = arith.constant 0 : index
    %c0_15 = arith.constant 0 : index
    %48 = vector.load %arg7[%c0_14, %c0_15] : memref<8x24xf32, #tpu.memory_space<vmem>>, vector<8x24xf32>
    %c0_16 = arith.constant 0 : index
    %c0_17 = arith.constant 0 : index
    %49 = vector.load %arg8[%c0_16, %c0_17] : memref<8x1xf32, #tpu.memory_space<vmem>>, vector<8x1xf32>
    %c0_18 = arith.constant 0 : index
    %c0_19 = arith.constant 0 : index
    %50 = vector.load %arg9[%c0_18, %c0_19] : memref<8x24xf32, #tpu.memory_space<vmem>>, vector<8x24xf32>
    %c0_20 = arith.constant 0 : index
    %c0_21 = arith.constant 0 : index
    %51 = vector.load %arg10[%c0_20, %c0_21] : memref<8x1xf32, #tpu.memory_space<vmem>>, vector<8x1xf32>
    %52 = vector.extract_strided_slice %47 {offsets = [0, 0], sizes = [8, 10], strides = [1, 1]} : vector<8x24xf32> to vector<8x10xf32>
    %53 = vector.extract_strided_slice %47 {offsets = [0, 1], sizes = [8, 10], strides = [1, 1]} : vector<8x24xf32> to vector<8x10xf32>
    %54 = vector.extract_strided_slice %47 {offsets = [0, 2], sizes = [8, 10], strides = [1, 1]} : vector<8x24xf32> to vector<8x10xf32>
    %55 = tpu.concatenate %52, %53, %54 in 0 : vector<8x10xf32>, vector<8x10xf32>, vector<8x10xf32> -> vector<24x10xf32>
    %56 = vector.extract_strided_slice %47 {offsets = [0, 12], sizes = [8, 10], strides = [1, 1]} : vector<8x24xf32> to vector<8x10xf32>
    %57 = vector.extract_strided_slice %47 {offsets = [0, 13], sizes = [8, 10], strides = [1, 1]} : vector<8x24xf32> to vector<8x10xf32>
    %58 = vector.extract_strided_slice %47 {offsets = [0, 14], sizes = [8, 10], strides = [1, 1]} : vector<8x24xf32> to vector<8x10xf32>
    %59 = tpu.concatenate %56, %57, %58 in 0 : vector<8x10xf32>, vector<8x10xf32>, vector<8x10xf32> -> vector<24x10xf32>
    %60 = tpu.concatenate %55, %59 in 1 : vector<24x10xf32>, vector<24x10xf32> -> vector<24x20xf32>
    %cst_22 = arith.constant dense<0.000000e+00> : vector<8x20xf32>
    %61 = tpu.matmul %48, %60, %cst_22 {dimension_numbers = #tpu.dot_dimension_numbers<[1], [0], [0], [1], [0, 0, 1, 1], [], []>} : vector<8x24xf32>, vector<24x20xf32>, vector<8x20xf32> -> vector<8x20xf32>
    %62 = vector.broadcast %49 : vector<8x1xf32> to vector<8x20xf32>
    %63 = arith.addf %61, %62 : vector<8x20xf32>
    %cst_23 = arith.constant 0.000000e+00 : f32
    %64 = vector.broadcast %cst_23 : f32 to vector<8x20xf32>
    %65 = arith.cmpf oge, %63, %64 : vector<8x20xf32>
    %cst_24 = arith.constant 0.00999999977 : f32
    %66 = vector.broadcast %cst_24 : f32 to vector<8x20xf32>
    %67 = arith.mulf %66, %63 : vector<8x20xf32>
    %68 = arith.select %65, %63, %67 : vector<8x20xi1>, vector<8x20xf32>
    %69 = vector.extract_strided_slice %68 {offsets = [0, 0], sizes = [8, 8], strides = [1, 1]} : vector<8x20xf32> to vector<8x8xf32>
    %70 = vector.extract_strided_slice %68 {offsets = [0, 1], sizes = [8, 8], strides = [1, 1]} : vector<8x20xf32> to vector<8x8xf32>
    %71 = vector.extract_strided_slice %68 {offsets = [0, 2], sizes = [8, 8], strides = [1, 1]} : vector<8x20xf32> to vector<8x8xf32>
    %72 = tpu.concatenate %69, %70, %71 in 0 : vector<8x8xf32>, vector<8x8xf32>, vector<8x8xf32> -> vector<24x8xf32>
    %73 = vector.extract_strided_slice %68 {offsets = [0, 10], sizes = [8, 8], strides = [1, 1]} : vector<8x20xf32> to vector<8x8xf32>
    %74 = vector.extract_strided_slice %68 {offsets = [0, 11], sizes = [8, 8], strides = [1, 1]} : vector<8x20xf32> to vector<8x8xf32>
    %75 = vector.extract_strided_slice %68 {offsets = [0, 12], sizes = [8, 8], strides = [1, 1]} : vector<8x20xf32> to vector<8x8xf32>
    %76 = tpu.concatenate %73, %74, %75 in 0 : vector<8x8xf32>, vector<8x8xf32>, vector<8x8xf32> -> vector<24x8xf32>
    %77 = tpu.concatenate %72, %76 in 1 : vector<24x8xf32>, vector<24x8xf32> -> vector<24x16xf32>
    %cst_25 = arith.constant dense<0.000000e+00> : vector<8x16xf32>
    %78 = tpu.matmul %50, %77, %cst_25 {dimension_numbers = #tpu.dot_dimension_numbers<[1], [0], [0], [1], [0, 0, 1, 1], [], []>} : vector<8x24xf32>, vector<24x16xf32>, vector<8x16xf32> -> vector<8x16xf32>
    %79 = vector.broadcast %51 : vector<8x1xf32> to vector<8x16xf32>
    %80 = arith.addf %78, %79 : vector<8x16xf32>
    %81 = math.tanh %80 : vector<8x16xf32>
    %82 = vector.extract_strided_slice %1 {offsets = [0, 2], sizes = [8, 8], strides = [1, 1]} : vector<8x24xf32> to vector<8x8xf32>
    %83 = vector.extract_strided_slice %1 {offsets = [0, 14], sizes = [8, 8], strides = [1, 1]} : vector<8x24xf32> to vector<8x8xf32>
    %84 = tpu.concatenate %82, %83 in 1 : vector<8x8xf32>, vector<8x8xf32> -> vector<8x16xf32>
    %85 = arith.subf %84, %81 : vector<8x16xf32>
    %c0_26 = arith.constant 0 : index
    %c0_27 = arith.constant 0 : index
    %86 = vector.load %arg11[%c0_26, %c0_27] : memref<8x16xf32, #tpu.memory_space<vmem>>, vector<8x16xf32>
    tpu.vector_store %arg11[%c0_26, %c0_27], %36 {strides = array<i32>} : memref<8x16xf32, #tpu.memory_space<vmem>>, vector<8x16xf32>,
    %c0_28 = arith.constant 0 : index
    %c0_29 = arith.constant 0 : index
    %87 = vector.load %arg12[%c0_28, %c0_29] : memref<8x16xf32, #tpu.memory_space<vmem>>, vector<8x16xf32>
    tpu.vector_store %arg12[%c0_28, %c0_29], %85 {strides = array<i32>} : memref<8x16xf32, #tpu.memory_space<vmem>>, vector<8x16xf32>,
    return
  }
  func.func @transform_0(%arg0: i32) -> (i32, i32) {
    %c0_i32 = arith.constant 0 : i32
    %c0_i32_0 = arith.constant 0 : i32
    return %c0_i32, %arg0 : i32, i32
  }
  func.func @transform_1(%arg0: i32) -> (i32, i32) {
    %c0_i32 = arith.constant 0 : i32
    %c0_i32_0 = arith.constant 0 : i32
    return %c0_i32, %arg0 : i32, i32
  }
  func.func @transform_2(%arg0: i32) -> (i32, i32) {
    %c0_i32 = arith.constant 0 : i32
    %c0_i32_0 = arith.constant 0 : i32
    %c0_i32_1 = arith.constant 0 : i32
    return %c0_i32, %c0_i32_0 : i32, i32
  }
  func.func @transform_3(%arg0: i32) -> (i32, i32) {
    %c0_i32 = arith.constant 0 : i32
    %c0_i32_0 = arith.constant 0 : i32
    %c0_i32_1 = arith.constant 0 : i32
    return %c0_i32, %c0_i32_0 : i32, i32
  }
  func.func @transform_4(%arg0: i32) -> (i32, i32) {
    %c0_i32 = arith.constant 0 : i32
    %c0_i32_0 = arith.constant 0 : i32
    %c0_i32_1 = arith.constant 0 : i32
    return %c0_i32, %c0_i32_0 : i32, i32
  }
  func.func @transform_5(%arg0: i32) -> (i32, i32) {
    %c0_i32 = arith.constant 0 : i32
    %c0_i32_0 = arith.constant 0 : i32
    %c0_i32_1 = arith.constant 0 : i32
    return %c0_i32, %c0_i32_0 : i32, i32
  }
  func.func @transform_6(%arg0: i32) -> (i32, i32) {
    %c0_i32 = arith.constant 0 : i32
    %c0_i32_0 = arith.constant 0 : i32
    %c0_i32_1 = arith.constant 0 : i32
    return %c0_i32, %c0_i32_0 : i32, i32
  }
  func.func @transform_7(%arg0: i32) -> (i32, i32) {
    %c0_i32 = arith.constant 0 : i32
    %c0_i32_0 = arith.constant 0 : i32
    %c0_i32_1 = arith.constant 0 : i32
    return %c0_i32, %c0_i32_0 : i32, i32
  }
  func.func @transform_8(%arg0: i32) -> (i32, i32) {
    %c0_i32 = arith.constant 0 : i32
    %c0_i32_0 = arith.constant 0 : i32
    %c0_i32_1 = arith.constant 0 : i32
    return %c0_i32, %c0_i32_0 : i32, i32
  }
  func.func @transform_9(%arg0: i32) -> (i32, i32) {
    %c0_i32 = arith.constant 0 : i32
    %c0_i32_0 = arith.constant 0 : i32
    %c0_i32_1 = arith.constant 0 : i32
    return %c0_i32, %c0_i32_0 : i32, i32
  }
  func.func @transform_10(%arg0: i32) -> (i32, i32) {
    %c0_i32 = arith.constant 0 : i32
    %c0_i32_0 = arith.constant 0 : i32
    return %c0_i32, %arg0 : i32, i32
  }
  func.func @transform_11(%arg0: i32) -> (i32, i32) {
    %c0_i32 = arith.constant 0 : i32
    %c0_i32_0 = arith.constant 0 : i32
    return %c0_i32, %arg0 : i32, i32
  }
}

</mosaic_0001>

<llo_original>
// kernel: tpu_custom_call.1
$region0: #{tpu_custom_call.1}
  #allocation0 [shape = 'u32[]', space=smem, size = 0x4, offset = 0x4, fixed_abs, tag = 'smem constant byte address 0x4 - core index']
  #allocation1 [shape = 'u32[144,128]{1,0:T(1,128)}', space=vmem, size = 0x12000, scoped, tag = 'internal scratch']
  %s0 = inlined_call_operand.vmem [shape: f32[8,16], index: 0, kind: input, shape index: {}]
  %s1 = inlined_call_operand.vmem [shape: f32[8,24], index: 1, kind: input, shape index: {}]
  %s2 = inlined_call_operand.vmem [shape: f32[8,24], index: 2, kind: input, shape index: {}]
  %s3 = inlined_call_operand.vmem [shape: f32[8,1], index: 3, kind: input, shape index: {}]
  %s4 = inlined_call_operand.vmem [shape: f32[8,24], index: 4, kind: input, shape index: {}]
  %s5 = inlined_call_operand.vmem [shape: f32[8,1], index: 5, kind: input, shape index: {}]
  %s6 = inlined_call_operand.vmem [shape: f32[8,24], index: 6, kind: input, shape index: {}]
  %s7 = inlined_call_operand.vmem [shape: f32[8,1], index: 7, kind: input, shape index: {}]
  %s8 = inlined_call_operand.vmem [shape: f32[8,24], index: 8, kind: input, shape index: {}]
  %s9 = inlined_call_operand.vmem [shape: f32[8,1], index: 9, kind: input, shape index: {}]
  %s10 = inlined_call_operand.hbm [shape: f32[8,16], index: 10, kind: output, shape index: {0}]
  %s11 = inlined_call_operand.hbm [shape: f32[8,16], index: 11, kind: output, shape index: {1}]
  %12 = xla_tuple %s10, %s11
  %s13 = sld [smem:[#allocation0]]
  $region58: #{tpu_custom_call.1} parent=0
    _
  %s15 = ssub.s32 1, %s13
  %s16 = scalar_select 0, %s15, %s13
  $region1: #{tpu_custom_call.1} parent=0
    #allocation2 [shape = 'u8[4096]{0}', space=vmem, size = 0x1000, scoped, tag = 'output window, operand 0, single buffered']
    #allocation3 [shape = 's32[1]{0}', space=sflag, size = 0x4, scoped, tag = 'scoped memory for tpu_custom_call.1']
    #allocation4 [shape = 'u8[4096]{0}', space=vmem, size = 0x1000, scoped, tag = 'output window, operand 1, single buffered']
    #allocation5 [shape = 's32[1]{0}', space=sflag, size = 0x4, scoped, tag = 'scoped memory for tpu_custom_call.1']
    %17 = vsyncpa [#allocation3], 0
    %18 = vsyncpa [#allocation5], 0
    // Predicated region
    $region2: #{tpu_custom_call.1} parent=1 // pred_check
      _
    $region3: #{tpu_custom_call.1} parent=1 // pred_check_branch
      %20 = sbr.rel (0) target = $region5
    $region4: #{tpu_custom_call.1} parent=1 // pred_region
      _
    $region5: #{tpu_custom_call.1} parent=1 // pred_fallthru
      _
    // Predicated region
    $region6: #{tpu_custom_call.1} parent=1 // pred_check
      _
    $region7: #{tpu_custom_call.1} parent=1 // pred_check_branch
      %22 = sbr.rel (0) target = $region9
    $region8: #{tpu_custom_call.1} parent=1 // pred_region
      _
    $region9: #{tpu_custom_call.1} parent=1 // pred_fallthru
      _
    // Predicated region
    $region10: #{tpu_custom_call.1} parent=1 // pred_check
      _
    $region11: #{tpu_custom_call.1} parent=1 // pred_check_branch
      %24 = sbr.rel (0) target = $region13
    $region12: #{tpu_custom_call.1} parent=1 // pred_region
      _
    $region13: #{tpu_custom_call.1} parent=1 // pred_fallthru
      _
    // Predicated region
    $region14: #{tpu_custom_call.1} parent=1 // pred_check
      _
    $region15: #{tpu_custom_call.1} parent=1 // pred_check_branch
      %26 = sbr.rel (0) target = $region17
    $region16: #{tpu_custom_call.1} parent=1 // pred_region
      _
    $region17: #{tpu_custom_call.1} parent=1 // pred_fallthru
      _
    // Predicated region
    $region18: #{tpu_custom_call.1} parent=1 // pred_check
      _
    $region19: #{tpu_custom_call.1} parent=1 // pred_check_branch
      %28 = sbr.rel (0) target = $region21
    $region20: #{tpu_custom_call.1} parent=1 // pred_region
      _
    $region21: #{tpu_custom_call.1} parent=1 // pred_fallthru
      _
    // Predicated region
    $region22: #{tpu_custom_call.1} parent=1 // pred_check
      _
    $region23: #{tpu_custom_call.1} parent=1 // pred_check_branch
      %30 = sbr.rel (0) target = $region25
    $region24: #{tpu_custom_call.1} parent=1 // pred_region
      _
    $region25: #{tpu_custom_call.1} parent=1 // pred_fallthru
      _
    // Predicated region
    $region26: #{tpu_custom_call.1} parent=1 // pred_check
      _
    $region27: #{tpu_custom_call.1} parent=1 // pred_check_branch
      %32 = sbr.rel (0) target = $region29
    $region28: #{tpu_custom_call.1} parent=1 // pred_region
      _
    $region29: #{tpu_custom_call.1} parent=1 // pred_fallthru
      _
    // Predicated region
    $region30: #{tpu_custom_call.1} parent=1 // pred_check
      _
    $region31: #{tpu_custom_call.1} parent=1 // pred_check_branch
      %34 = sbr.rel (0) target = $region33
    $region32: #{tpu_custom_call.1} parent=1 // pred_region
      _
    $region33: #{tpu_custom_call.1} parent=1 // pred_fallthru
      _
    // Predicated region
    $region34: #{tpu_custom_call.1} parent=1 // pred_check
      _
    $region35: #{tpu_custom_call.1} parent=1 // pred_check_branch
      %36 = sbr.rel (0) target = $region37
    $region36: #{tpu_custom_call.1} parent=1 // pred_region
      _
    $region37: #{tpu_custom_call.1} parent=1 // pred_fallthru
      _
    // Predicated region
    $region38: #{tpu_custom_call.1} parent=1 // pred_check
      _
    $region39: #{tpu_custom_call.1} parent=1 // pred_check_branch
      %38 = sbr.rel (0) target = $region41
    $region40: #{tpu_custom_call.1} parent=1 // pred_region
      _
    $region41: #{tpu_custom_call.1} parent=1 // pred_fallthru
      _
    %v39 = vld [vmem:[%s0] sm:$0xff]
    %v40 = vld [vmem:[%s1] sm:$0xff]
    %v41 = vld [vmem:[%s2] sm:$0xff]
    %v42 = vld [vmem:[%s3] sm:$0xff]
    %v43 = vld [vmem:[%s4] sm:$0xff]
    %v44 = vld [vmem:[%s5] sm:$0xff]
    %46 = vrot.lane.b32.xlu0 %v40, 127
    %v47 = vpop.permute.xlu0 %46
    %49 = vrot.lane.b32.xlu0 %v40, 126
    %v50 = vpop.permute.xlu0 %49
    %52 = vrot.lane.b32.xlu0 %v47, 126
    %v53 = vpop.permute.xlu0 %52
    %54 = vrot.lane.b32.xlu0 %v50, 126
    %v55 = vpop.permute.xlu0 %54
    %vm58 = vcmask 80896
    %v59 = vsel %vm58, %v40, %v50
    %v60 = vsel %vm58, %v47, %v53
    %v61 = vsel %vm58, %v50, %v55
    %63 = vset.pattern.permute.xlu0 0
    %64 = vperm.xlu0 %63, %v42
    %v65 = vpop.permute.xlu0 %64
    %vm67 = vcmask 195584
    %v69 = vsel %vm67, %v41, 0
    %71 = vmatprep.subr.mxu0 0.0
    %72 = vmatpush1.msra.mxu0 %v59
    %73 = vmatprep.subr.mxu0 0.0
    %74 = vmatpush1.msra.mxu0 %v60
    %75 = vmatprep.subr.mxu0 0.0
    %76 = vmatpush1.msra.mxu0 %v61
    %77 = vmatprep.subr.mxu0 0.0
    %78 = vmatpush1.msra.mxu0 0.0
    %79 = vmatprep.subr.mxu0 0.0
    %80 = vmatpush1.msra.mxu0 0.0
    %81 = vmatprep.subr.mxu0 0.0
    %82 = vmatpush1.msra.mxu0 0.0
    %83 = vmatprep.subr.mxu0 0.0
    %84 = vmatpush1.msra.mxu0 0.0
    %85 = vmatprep.subr.mxu0 0.0
    %86 = vmatpush1.msra.mxu0 0.0
    %87 = vmatprep.subr.mxu0 0.0
    %88 = vmatpush1.msra.mxu0 0.0
    %89 = vmatprep.subr.mxu0 0.0
    %90 = vmatpush1.msra.mxu0 0.0
    %91 = vmatprep.subr.mxu0 0.0
    %92 = vmatpush1.msra.mxu0 0.0
    %93 = vmatprep.subr.mxu0 0.0
    %94 = vmatpush1.msra.mxu0 0.0
    %95 = vmatprep.subr.mxu0 0.0
    %96 = vmatpush1.msra.mxu0 0.0
    %97 = vmatprep.subr.mxu0 0.0
    %98 = vmatpush1.msra.mxu0 0.0
    %99 = vmatprep.subr.mxu0 0.0
    %100 = vmatpush1.msra.mxu0 0.0
    %101 = vmatprep.subr.mxu0 0.0
    %102 = vmatpush1.msra.mxu0 0.0
    %103 = vmatprep.subr.mxu0 0.0
    %104 = vmatpush1.msra.mxu0 0.0
    %105 = vmatprep.subr.mxu0 0.0
    %106 = vmatpush1.msra.mxu0 0.0
    %107 = vmatprep.subr.mxu0 0.0
    %108 = vmatpush1.msra.mxu0 0.0
    %109 = vmatprep.subr.mxu0 0.0
    %110 = vmatpush1.msra.mxu0 0.0
    %111 = vmatprep.subr.mxu0 0.0
    %112 = vmatpush1.msra.mxu0 0.0
    %113 = vmatprep.subr.mxu0 0.0
    %114 = vmatpush1.msra.mxu0 0.0
    %115 = vmatprep.subr.mxu0 0.0
    %116 = vmatpush1.msra.mxu0 0.0
    %117 = vmatprep.subr.mxu0 0.0
    %118 = vmatpush1.msra.mxu0 0.0
    %119 = vmatprep.subr.mxu0 0.0
    %120 = vmatpush1.msra.mxu0 0.0
    %121 = vmatprep.subr.mxu0 0.0
    %122 = vmatpush1.msra.mxu0 0.0
    %123 = vmatprep.subr.mxu0 0.0
    %124 = vmatpush1.msra.mxu0 0.0
    %125 = vmatprep.subr.mxu0 0.0
    %126 = vmatpush1.msra.mxu0 0.0
    %127 = vmatprep.subr.mxu0 0.0
    %128 = vmatpush1.msra.mxu0 0.0
    %129 = vmatprep.subr.mxu0 0.0
    %130 = vmatpush1.msra.mxu0 0.0
    %131 = vmatprep.subr.mxu0 0.0
    %132 = vmatpush1.msra.mxu0 0.0
    %133 = vmatprep.subr.mxu0 0.0
    %134 = vmatpush1.msra.mxu0 0.0
    %135 = vmatprep.mubr.f32.mxu0 0.0
    %136 = vmatmul.mubr.f32.gmra.mrb[0].mxu0 %v69
    %v137 = vpop.f32.mrb[0].mxu0
    %v138 = vadd.f32 %v65, %v137
    %v139 = vpop.f32.mrb[0].mxu0
    %140 = vdwg.mxu0
    %vm141 = vcmp.ge.f32.partialorder %v138, 0.0
    %v142 = vmul.f32 %v138, 0.01
    %v143 = vsel %vm141, %v138, %v142
    %145 = vrot.lane.b32.xlu0 %v143, 127
    %v146 = vpop.permute.xlu0 %145
    %148 = vrot.lane.b32.xlu0 %v143, 126
    %v149 = vpop.permute.xlu0 %148
    %151 = vrot.lane.b32.xlu0 %v146, 126
    %v152 = vpop.permute.xlu0 %151
    %153 = vrot.lane.b32.xlu0 %v149, 126
    %v154 = vpop.permute.xlu0 %153
    %vm157 = vcmask 64512
    %v158 = vsel %vm157, %v143, %v149
    %v159 = vsel %vm157, %v146, %v152
    %v160 = vsel %vm157, %v149, %v154
    %162 = vset.pattern.permute.xlu0 0
    %163 = vperm.xlu0 %162, %v44
    %v164 = vpop.permute.xlu0 %163
    %v167 = vsel %vm67, %v43, 0
    %169 = vmatprep.subr.mxu0 0.0
    %170 = vmatpush1.msra.mxu0 %v158
    %171 = vmatprep.subr.mxu0 0.0
    %172 = vmatpush1.msra.mxu0 %v159
    %173 = vmatprep.subr.mxu0 0.0
    %174 = vmatpush1.msra.mxu0 %v160
    %175 = vmatprep.subr.mxu0 0.0
    %176 = vmatpush1.msra.mxu0 0.0
    %177 = vmatprep.subr.mxu0 0.0
    %178 = vmatpush1.msra.mxu0 0.0
    %179 = vmatprep.subr.mxu0 0.0
    %180 = vmatpush1.msra.mxu0 0.0
    %181 = vmatprep.subr.mxu0 0.0
    %182 = vmatpush1.msra.mxu0 0.0
    %183 = vmatprep.subr.mxu0 0.0
    %184 = vmatpush1.msra.mxu0 0.0
    %185 = vmatprep.subr.mxu0 0.0
    %186 = vmatpush1.msra.mxu0 0.0
    %187 = vmatprep.subr.mxu0 0.0
    %188 = vmatpush1.msra.mxu0 0.0
    %189 = vmatprep.subr.mxu0 0.0
    %190 = vmatpush1.msra.mxu0 0.0
    %191 = vmatprep.subr.mxu0 0.0
    %192 = vmatpush1.msra.mxu0 0.0
    %193 = vmatprep.subr.mxu0 0.0
    %194 = vmatpush1.msra.mxu0 0.0
    %195 = vmatprep.subr.mxu0 0.0
    %196 = vmatpush1.msra.mxu0 0.0
    %197 = vmatprep.subr.mxu0 0.0
    %198 = vmatpush1.msra.mxu0 0.0
    %199 = vmatprep.subr.mxu0 0.0
    %200 = vmatpush1.msra.mxu0 0.0
    %201 = vmatprep.subr.mxu0 0.0
    %202 = vmatpush1.msra.mxu0 0.0
    %203 = vmatprep.subr.mxu0 0.0
    %204 = vmatpush1.msra.mxu0 0.0
    %205 = vmatprep.subr.mxu0 0.0
    %206 = vmatpush1.msra.mxu0 0.0
    %207 = vmatprep.subr.mxu0 0.0
    %208 = vmatpush1.msra.mxu0 0.0
    %209 = vmatprep.subr.mxu0 0.0
    %210 = vmatpush1.msra.mxu0 0.0
    %211 = vmatprep.subr.mxu0 0.0
    %212 = vmatpush1.msra.mxu0 0.0
    %213 = vmatprep.subr.mxu0 0.0
    %214 = vmatpush1.msra.mxu0 0.0
    %215 = vmatprep.subr.mxu0 0.0
    %216 = vmatpush1.msra.mxu0 0.0
    %217 = vmatprep.subr.mxu0 0.0
    %218 = vmatpush1.msra.mxu0 0.0
    %219 = vmatprep.subr.mxu0 0.0
    %220 = vmatpush1.msra.mxu0 0.0
    %221 = vmatprep.subr.mxu0 0.0
    %222 = vmatpush1.msra.mxu0 0.0
    %223 = vmatprep.subr.mxu0 0.0
    %224 = vmatpush1.msra.mxu0 0.0
    %225 = vmatprep.subr.mxu0 0.0
    %226 = vmatpush1.msra.mxu0 0.0
    %227 = vmatprep.subr.mxu0 0.0
    %228 = vmatpush1.msra.mxu0 0.0
    %229 = vmatprep.subr.mxu0 0.0
    %230 = vmatpush1.msra.mxu0 0.0
    %231 = vmatprep.subr.mxu0 0.0
    %232 = vmatpush1.msra.mxu0 0.0
    %233 = vmatprep.mubr.f32.mxu0 0.0
    %234 = vmatmul.mubr.f32.gmra.mrb[0].mxu0 %v167
    %v235 = vpop.f32.mrb[0].mxu0
    %v236 = vadd.f32 %v164, %v235
    %v237 = vpop.f32.mrb[0].mxu0
    %238 = vdwg.mxu0
    %v239 = vtanh.pop %v236
    %v240 = vadd.f32 %v39, %v239
    %242 = vrot.lane.b32.xlu0 %v240, 126
    %v243 = vpop.permute.xlu0 %242
    %245 = vrot.lane.b32.xlu0 %v240, 2
    %v246 = vpop.permute.xlu0 %245
    %248 = vrot.lane.b32.xlu0 %v240, 4
    %v249 = vpop.permute.xlu0 %248
    %251 = vrot.lane.b32.xlu0 %v240, 6
    %v252 = vpop.permute.xlu0 %251
    %254 = vrot.lane.b32.xlu0 %v240, 8
    %v255 = vpop.permute.xlu0 %254
    %257 = vrot.lane.b32.xlu0 %v240, 10
    %v258 = vpop.permute.xlu0 %257
    %vm260 = vcmask 7168
    %v261 = vsel %vm260, %v243, %v240
    %vm262 = vcmask 15360
    %v263 = vsel %vm262, %v261, %v246
    %v264 = vsel %vm58, %v263, %v249
    %vm265 = vcmask 89088
    %v266 = vsel %vm265, %v264, %v252
    %vm267 = vcmask 97280
    %v268 = vsel %vm267, %v266, %v246
    %vm269 = vcmask 105472
    %v270 = vsel %vm269, %v268, %v249
    %vm271 = vcmask 113664
    %v272 = vsel %vm271, %v270, %v252
    %vm273 = vcmask 179200
    %v274 = vsel %vm273, %v272, %v255
    %vm275 = vcmask 187392
    %v276 = vsel %vm275, %v274, %v258
    %v277 = vld [vmem:[%s6] sm:$0xff]
    %v278 = vld [vmem:[%s7] sm:$0xff]
    %v279 = vld [vmem:[%s8] sm:$0xff]
    %v280 = vld [vmem:[%s9] sm:$0xff]
    %282 = vrot.lane.b32.xlu0 %v276, 127
    %v283 = vpop.permute.xlu0 %282
    %285 = vrot.lane.b32.xlu0 %v276, 126
    %v286 = vpop.permute.xlu0 %285
    %288 = vrot.lane.b32.xlu0 %v283, 126
    %v289 = vpop.permute.xlu0 %288
    %290 = vrot.lane.b32.xlu0 %v286, 126
    %v291 = vpop.permute.xlu0 %290
    %v294 = vsel %vm58, %v276, %v286
    %v295 = vsel %vm58, %v283, %v289
    %v296 = vsel %vm58, %v286, %v291
    %298 = vset.pattern.permute.xlu0 0
    %299 = vperm.xlu0 %298, %v278
    %v300 = vpop.permute.xlu0 %299
    %v303 = vsel %vm67, %v277, 0
    %305 = vmatprep.subr.mxu0 0.0
    %306 = vmatpush1.msra.mxu0 %v294
    %307 = vmatprep.subr.mxu0 0.0
    %308 = vmatpush1.msra.mxu0 %v295
    %309 = vmatprep.subr.mxu0 0.0
    %310 = vmatpush1.msra.mxu0 %v296
    %311 = vmatprep.subr.mxu0 0.0
    %312 = vmatpush1.msra.mxu0 0.0
    %313 = vmatprep.subr.mxu0 0.0
    %314 = vmatpush1.msra.mxu0 0.0
    %315 = vmatprep.subr.mxu0 0.0
    %316 = vmatpush1.msra.mxu0 0.0
    %317 = vmatprep.subr.mxu0 0.0
    %318 = vmatpush1.msra.mxu0 0.0
    %319 = vmatprep.subr.mxu0 0.0
    %320 = vmatpush1.msra.mxu0 0.0
    %321 = vmatprep.subr.mxu0 0.0
    %322 = vmatpush1.msra.mxu0 0.0
    %323 = vmatprep.subr.mxu0 0.0
    %324 = vmatpush1.msra.mxu0 0.0
    %325 = vmatprep.subr.mxu0 0.0
    %326 = vmatpush1.msra.mxu0 0.0
    %327 = vmatprep.subr.mxu0 0.0
    %328 = vmatpush1.msra.mxu0 0.0
    %329 = vmatprep.subr.mxu0 0.0
    %330 = vmatpush1.msra.mxu0 0.0
    %331 = vmatprep.subr.mxu0 0.0
    %332 = vmatpush1.msra.mxu0 0.0
    %333 = vmatprep.subr.mxu0 0.0
    %334 = vmatpush1.msra.mxu0 0.0
    %335 = vmatprep.subr.mxu0 0.0
    %336 = vmatpush1.msra.mxu0 0.0
    %337 = vmatprep.subr.mxu0 0.0
    %338 = vmatpush1.msra.mxu0 0.0
    %339 = vmatprep.subr.mxu0 0.0
    %340 = vmatpush1.msra.mxu0 0.0
    %341 = vmatprep.subr.mxu0 0.0
    %342 = vmatpush1.msra.mxu0 0.0
    %343 = vmatprep.subr.mxu0 0.0
    %344 = vmatpush1.msra.mxu0 0.0
    %345 = vmatprep.subr.mxu0 0.0
    %346 = vmatpush1.msra.mxu0 0.0
    %347 = vmatprep.subr.mxu0 0.0
    %348 = vmatpush1.msra.mxu0 0.0
    %349 = vmatprep.subr.mxu0 0.0
    %350 = vmatpush1.msra.mxu0 0.0
    %351 = vmatprep.subr.mxu0 0.0
    %352 = vmatpush1.msra.mxu0 0.0
    %353 = vmatprep.subr.mxu0 0.0
    %354 = vmatpush1.msra.mxu0 0.0
    %355 = vmatprep.subr.mxu0 0.0
    %356 = vmatpush1.msra.mxu0 0.0
    %357 = vmatprep.subr.mxu0 0.0
    %358 = vmatpush1.msra.mxu0 0.0
    %359 = vmatprep.subr.mxu0 0.0
    %360 = vmatpush1.msra.mxu0 0.0
    %361 = vmatprep.subr.mxu0 0.0
    %362 = vmatpush1.msra.mxu0 0.0
    %363 = vmatprep.subr.mxu0 0.0
    %364 = vmatpush1.msra.mxu0 0.0
    %365 = vmatprep.subr.mxu0 0.0
    %366 = vmatpush1.msra.mxu0 0.0
    %367 = vmatprep.subr.mxu0 0.0
    %368 = vmatpush1.msra.mxu0 0.0
    %369 = vmatprep.mubr.f32.mxu0 0.0
    %370 = vmatmul.mubr.f32.gmra.mrb[0].mxu0 %v303
    %v371 = vpop.f32.mrb[0].mxu0
    %v372 = vadd.f32 %v300, %v371
    %v373 = vpop.f32.mrb[0].mxu0
    %374 = vdwg.mxu0
    %vm375 = vcmp.ge.f32.partialorder %v372, 0.0
    %v376 = vmul.f32 %v372, 0.01
    %v377 = vsel %vm375, %v372, %v376
    %379 = vrot.lane.b32.xlu0 %v377, 127
    %v380 = vpop.permute.xlu0 %379
    %382 = vrot.lane.b32.xlu0 %v377, 126
    %v383 = vpop.permute.xlu0 %382
    %385 = vrot.lane.b32.xlu0 %v380, 126
    %v386 = vpop.permute.xlu0 %385
    %387 = vrot.lane.b32.xlu0 %v383, 126
    %v388 = vpop.permute.xlu0 %387
    %v391 = vsel %vm157, %v377, %v383
    %v392 = vsel %vm157, %v380, %v386
    %v393 = vsel %vm157, %v383, %v388
    %395 = vset.pattern.permute.xlu0 0
    %396 = vperm.xlu0 %395, %v280
    %v397 = vpop.permute.xlu0 %396
    %v400 = vsel %vm67, %v279, 0
    %402 = vmatprep.subr.mxu0 0.0
    %403 = vmatpush1.msra.mxu0 %v391
    %404 = vmatprep.subr.mxu0 0.0
    %405 = vmatpush1.msra.mxu0 %v392
    %406 = vmatprep.subr.mxu0 0.0
    %407 = vmatpush1.msra.mxu0 %v393
    %408 = vmatprep.subr.mxu0 0.0
    %409 = vmatpush1.msra.mxu0 0.0
    %410 = vmatprep.subr.mxu0 0.0
    %411 = vmatpush1.msra.mxu0 0.0
    %412 = vmatprep.subr.mxu0 0.0
    %413 = vmatpush1.msra.mxu0 0.0
    %414 = vmatprep.subr.mxu0 0.0
    %415 = vmatpush1.msra.mxu0 0.0
    %416 = vmatprep.subr.mxu0 0.0
    %417 = vmatpush1.msra.mxu0 0.0
    %418 = vmatprep.subr.mxu0 0.0
    %419 = vmatpush1.msra.mxu0 0.0
    %420 = vmatprep.subr.mxu0 0.0
    %421 = vmatpush1.msra.mxu0 0.0
    %422 = vmatprep.subr.mxu0 0.0
    %423 = vmatpush1.msra.mxu0 0.0
    %424 = vmatprep.subr.mxu0 0.0
    %425 = vmatpush1.msra.mxu0 0.0
    %426 = vmatprep.subr.mxu0 0.0
    %427 = vmatpush1.msra.mxu0 0.0
    %428 = vmatprep.subr.mxu0 0.0
    %429 = vmatpush1.msra.mxu0 0.0
    %430 = vmatprep.subr.mxu0 0.0
    %431 = vmatpush1.msra.mxu0 0.0
    %432 = vmatprep.subr.mxu0 0.0
    %433 = vmatpush1.msra.mxu0 0.0
    %434 = vmatprep.subr.mxu0 0.0
    %435 = vmatpush1.msra.mxu0 0.0
    %436 = vmatprep.subr.mxu0 0.0
    %437 = vmatpush1.msra.mxu0 0.0
    %438 = vmatprep.subr.mxu0 0.0
    %439 = vmatpush1.msra.mxu0 0.0
    %440 = vmatprep.subr.mxu0 0.0
    %441 = vmatpush1.msra.mxu0 0.0
    %442 = vmatprep.subr.mxu0 0.0
    %443 = vmatpush1.msra.mxu0 0.0
    %444 = vmatprep.subr.mxu0 0.0
    %445 = vmatpush1.msra.mxu0 0.0
    %446 = vmatprep.subr.mxu0 0.0
    %447 = vmatpush1.msra.mxu0 0.0
    %448 = vmatprep.subr.mxu0 0.0
    %449 = vmatpush1.msra.mxu0 0.0
    %450 = vmatprep.subr.mxu0 0.0
    %451 = vmatpush1.msra.mxu0 0.0
    %452 = vmatprep.subr.mxu0 0.0
    %453 = vmatpush1.msra.mxu0 0.0
    %454 = vmatprep.subr.mxu0 0.0
    %455 = vmatpush1.msra.mxu0 0.0
    %456 = vmatprep.subr.mxu0 0.0
    %457 = vmatpush1.msra.mxu0 0.0
    %458 = vmatprep.subr.mxu0 0.0
    %459 = vmatpush1.msra.mxu0 0.0
    %460 = vmatprep.subr.mxu0 0.0
    %461 = vmatpush1.msra.mxu0 0.0
    %462 = vmatprep.subr.mxu0 0.0
    %463 = vmatpush1.msra.mxu0 0.0
    %464 = vmatprep.subr.mxu0 0.0
    %465 = vmatpush1.msra.mxu0 0.0
    %466 = vmatprep.mubr.f32.mxu0 0.0
    %467 = vmatmul.mubr.f32.gmra.mrb[0].mxu0 %v400
    %v468 = vpop.f32.mrb[0].mxu0
    %v469 = vadd.f32 %v397, %v468
    %v470 = vpop.f32.mrb[0].mxu0
    %471 = vdwg.mxu0
    %v472 = vtanh.pop %v469
    %473 = vrot.lane.b32.xlu0 %v40, 122
    %v474 = vpop.permute.xlu0 %473
    %v476 = vsel %vm157, %v50, %v474
    %v477 = vsub.f32 %v476, %v472
    %vm478 = vcmask 130048
    %479 = vst.msk [vmem:[#allocation2] sm:$0xff] %vm478, %v240
    %480 = vst.msk [vmem:[#allocation4] sm:$0xff] %vm478, %v477
    // Predicated region
    $region42: #{tpu_custom_call.1} parent=1 // pred_check
      _
    $region43: #{tpu_custom_call.1} parent=1 // pred_check_branch
      %482 = sbr.rel (0) target = $region45
    $region44: #{tpu_custom_call.1} parent=1 // pred_region
      %s484 = ssub.s32 128, 128
      %485 = vsyncadd [#allocation3], %s484
      %s487 = sshll.u32 [#allocation2], 4
      %s488 = int_to_ptr.vmem [resolvable:$true] %s487
      %490 = dma.vmem_to_hbm [thread:$0]  %s488, 128, %s10, [#allocation3]
    $region45: #{tpu_custom_call.1} parent=1 // pred_fallthru
      _
    // Predicated region
    $region46: #{tpu_custom_call.1} parent=1 // pred_check
      _
    $region47: #{tpu_custom_call.1} parent=1 // pred_check_branch
      %492 = sbr.rel (0) target = $region49
    $region48: #{tpu_custom_call.1} parent=1 // pred_region
      %s494 = ssub.s32 128, 128
      %495 = vsyncadd [#allocation5], %s494
      %s497 = sshll.u32 [#allocation4], 4
      %s498 = int_to_ptr.vmem [resolvable:$true] %s497
      %500 = dma.vmem_to_hbm [thread:$0]  %s498, 128, %s11, [#allocation5]
    $region49: #{tpu_custom_call.1} parent=1 // pred_fallthru
      _
    // Predicated region
    $region50: #{tpu_custom_call.1} parent=1 // pred_check
      _
    $region51: #{tpu_custom_call.1} parent=1 // pred_check_branch
      %502 = sbr.rel (0) target = $region53
    $region52: #{tpu_custom_call.1} parent=1 // pred_region
      %503 = dma.done [#allocation3], 128
    $region53: #{tpu_custom_call.1} parent=1 // pred_fallthru
      _
    // Predicated region
    $region54: #{tpu_custom_call.1} parent=1 // pred_check
      _
    $region55: #{tpu_custom_call.1} parent=1 // pred_check_branch
      %505 = sbr.rel (0) target = $region57
    $region56: #{tpu_custom_call.1} parent=1 // pred_region
      %506 = dma.done [#allocation5], 128
    $region57: #{tpu_custom_call.1} parent=1 // pred_fallthru
      _
    %507 = vsyncpa [#allocation3], 1
    %508 = vsyncpa [#allocation5], 1

</llo_original>
